<compile_context>
chip_gen: v6e
topology: v6e:2x2x1
jax: 0.10.0
libtpu: 0.0.40
codegen_flags: <defaults>
</compile_context>

<pallas_src>
import functools

import jax
import jax.numpy as jnp
from jax.experimental import pallas as pl
from jax.experimental.pallas import tpu as pltpu


# --------------------------------------------------------------------------
# Generation-aware budgets.
# --------------------------------------------------------------------------
def _tpu_generation_info():
    """Returns (vmem_budget_bytes, default_scoped_bytes, native_bf16_vpu)."""
    try:
        kind = jax.devices()[0].device_kind.lower()
    except Exception:  # pragma: no cover - defensive only
        kind = ""
    if "v5" in kind:
        # v5e/v5p: 128 MiB physical VMEM, 16 MiB default scoped, no bf16 VALU.
        return 96 << 20, 16 << 20, False
    if "v6" in kind:
        # v6e: 128 MiB physical, 32 MiB default scoped, bf16 VALU.
        return 96 << 20, 32 << 20, True
    if "7" in kind:
        # v7x: only 64 MiB physical per TensorCore -> leave headroom for
        # internal scratch / semaphores / pipeline state.
        return 48 << 20, 32 << 20, True
    # Unknown generation: conservative budget, always-correct f32 math.
    return 48 << 20, 16 << 20, False


# --------------------------------------------------------------------------
# Kernels.
# --------------------------------------------------------------------------
def _se_fused_kernel(x_ref, w1t_ref, w2_ref, o_ref, *, native_scale):
    # x_ref : (C, HW)     w1t_ref : (C, Cr) == (W1 * (1/HW))^T
    # w2_ref: (C, Cr)     o_ref   : (C, HW)

    # Squeeze: lane-sum over the spatial axis; 1/HW is folded into w1t and the
    # pooled accumulation stays in f32 regardless of input dtype.
    pooled = jnp.sum(x_ref[...].astype(jnp.float32), axis=1, keepdims=True)      # (C, 1)

    # Excitation FC1 + ReLU / FC2 + Sigmoid on VPU/XLU (no degenerate N=1 MXU).
    h = jnp.maximum(jnp.sum(w1t_ref[...] * pooled, axis=0, keepdims=True), 0.0)  # (1, Cr)
    s = jax.nn.sigmoid(jnp.sum(w2_ref[...] * h, axis=1, keepdims=True))          # (C, 1)

    if native_scale:
        # bf16 VALU path (v6e/v7x): one bf16 multiply pass, no full-slab casts.
        o_ref[...] = x_ref[...] * s.astype(o_ref.dtype)
    else:
        o_ref[...] = (x_ref[...].astype(jnp.float32) * s).astype(o_ref.dtype)


def _se_scale_kernel(x_ref, g_ref, o_ref):
    # x_ref: (c_tile, hw_tile)   g_ref: (c_tile, 1)   o_ref: (c_tile, hw_tile)
    o_ref[...] = (x_ref[...] * g_ref[...]).astype(o_ref.dtype)


# --------------------------------------------------------------------------
# Wrappers.
# --------------------------------------------------------------------------
def _se_fused(x2, w1, w2, hw, native_bf16, vmem_budget, default_scoped):
    B, C, HW = x2.shape
    Cr = w1.shape[0]

    # Fold the average-pool divisor into W1 and pre-transpose so the kernel
    # needs no in-kernel transposes and no division pass over the slab.
    w1t = (w1.astype(jnp.float32) * (1.0 / hw)).T      # (C, Cr)
    w2f = w2.astype(jnp.float32)                       # (C, Cr)

    itemsize = x2.dtype.itemsize
    slab_bytes = C * HW * itemsize
    w_bytes = 2 * (C * Cr * 4)                                  # both weights, f32
    vmem_needed = 4 * slab_bytes + 2 * w_bytes + (2 << 20)      # dbl-buffered in/out
    vmem_limit = None
    if vmem_needed > default_scoped:
        vmem_limit = int(min(vmem_needed, vmem_budget))

    native_scale = bool(native_bf16 and x2.dtype == jnp.bfloat16)

    cost = pl.CostEstimate(
        flops=int(B * (2 * C * HW + 4 * C * Cr)),
        transcendentals=int(B * C),
        bytes_accessed=int(2 * B * slab_bytes + w_bytes),
    )

    return pl.pallas_call(
        functools.partial(_se_fused_kernel, native_scale=native_scale),
        out_shape=jax.ShapeDtypeStruct((B, C, HW), x2.dtype),
        grid_spec=pltpu.PrefetchScalarGridSpec(
            num_scalar_prefetch=0,
            grid=(B,),
            in_specs=[
                # Full HW extent per block: no wrapper pad, masked vst only on
                # the final partial lane vreg when HW % 128 != 0.
                pl.BlockSpec((None, C, HW), lambda b: (b, 0, 0)),
                pl.BlockSpec((C, Cr), lambda b: (0, 0)),   # resident weights
                pl.BlockSpec((C, Cr), lambda b: (0, 0)),
            ],
            out_specs=pl.BlockSpec((None, C, HW), lambda b: (b, 0, 0)),
        ),
        compiler_params=pltpu.CompilerParams(
            dimension_semantics=("parallel",),
            vmem_limit_bytes=vmem_limit,
        ),
        cost_estimate=cost,
    )(x2, w1t, w2f)


def _se_two_phase(x2, w1, w2, native_bf16, vmem_budget):
    """Gate precompute (XLA, batched MXU matmuls) + tiled scale-only kernel."""
    B, C, HW = x2.shape

    # Phase 1: pool + both FCs batched over B as real matmuls (tiny, MXU/XLA).
    pooled = jnp.mean(x2.astype(jnp.float32), axis=2)             # (B, C)
    h = jnp.maximum(pooled @ w1.astype(jnp.float32).T, 0.0)       # (B, Cr)
    g = jax.nn.sigmoid(h @ w2.astype(jnp.float32).T)              # (B, C)
    native_scale = bool(native_bf16 and x2.dtype == jnp.bfloat16)
    g = g.astype(x2.dtype if native_scale else jnp.float32)[..., None]   # (B, C, 1)

    # Phase 2: all-parallel, lane-dense scale pass (streams near the HBM
    # roofline and shards across megacore / both v7x TensorCores).
    itemsize = x2.dtype.itemsize
    hw_tile = HW if HW <= 1024 else 1024          # full dim or 128-multiple
    c_tile = C if C <= 512 else 512               # full dim or 8-multiple
    while 4 * c_tile * hw_tile * itemsize > vmem_budget and hw_tile > 128:
        hw_tile = max(128, hw_tile // 2)
    grid = (B, pl.cdiv(C, c_tile), pl.cdiv(HW, hw_tile))

    cost = pl.CostEstimate(
        flops=int(B * C * HW),
        transcendentals=0,
        bytes_accessed=int(2 * B * C * HW * itemsize + g.size * g.dtype.itemsize),
    )

    return pl.pallas_call(
        _se_scale_kernel,
        out_shape=jax.ShapeDtypeStruct((B, C, HW), x2.dtype),
        grid_spec=pltpu.PrefetchScalarGridSpec(
            num_scalar_prefetch=0,
            grid=grid,
            in_specs=[
                pl.BlockSpec((None, c_tile, hw_tile), lambda b, ci, ti: (b, ci, ti)),
                pl.BlockSpec((None, c_tile, 1), lambda b, ci, ti: (b, ci, 0)),
            ],
            out_specs=pl.BlockSpec((None, c_tile, hw_tile), lambda b, ci, ti: (b, ci, ti)),
        ),
        compiler_params=pltpu.CompilerParams(
            dimension_semantics=("parallel", "parallel", "parallel"),
        ),
        cost_estimate=cost,
    )(x2, g)


def se_layer(x, w1, w2, *, path="auto"):
    """SELayer forward.

    x : (B, C, H, W)   input (NCHW, as in the PyTorch module)
    w1: (C // r, C)    first Linear weight (PyTorch (out, in) layout)
    w2: (C, C // r)    second Linear weight
    path: "auto" | "fused" | "two_phase"
    returns (B, C, H, W)
    """
    B, C, H, W = x.shape
    Cr = w1.shape[0]
    HW = H * W
    x2 = x.reshape(B, C, HW)            # metadata-only reshape, no HBM copy

    vmem_budget, default_scoped, native_bf16 = _tpu_generation_info()

    slab_bytes = C * HW * x.dtype.itemsize
    fused_needed = 4 * slab_bytes + 4 * (C * Cr * 4) + (2 << 20)

    # Two-phase when the fused slab would not fit the per-generation VMEM
    # budget, or for small-batch shapes with enough scale tiles that the extra
    # HBM read of x is paid back by pipelining / megacore sharding.
    n_scale_tiles = B * pl.cdiv(C, min(C, 512)) * pl.cdiv(HW, min(HW, 1024))
    small_batch_starved = (B <= 2) and (n_scale_tiles >= 8)

    if path == "two_phase":
        use_two_phase = True
    elif path == "fused":
        use_two_phase = False
    else:
        use_two_phase = (fused_needed > vmem_budget) or small_batch_starved

    if use_two_phase:
        out = _se_two_phase(x2, w1, w2, native_bf16, vmem_budget)
    else:
        out = _se_fused(x2, w1, w2, HW, native_bf16, vmem_budget, default_scoped)
    return out.reshape(B, C, H, W)


# --------------------------------------------------------------------------
# Pure-JAX reference and self-test.
# --------------------------------------------------------------------------
def se_layer_ref(x, w1, w2):
    """Pure-JAX reference matching the PyTorch forward semantics (f32 math)."""
    xf = x.astype(jnp.float32)
    y = jnp.mean(xf, axis=(2, 3))                              # AdaptiveAvgPool2d(1)
    y = jnp.maximum(y @ w1.astype(jnp.float32).T, 0.0)         # Linear + ReLU
    y = jax.nn.sigmoid(y @ w2.astype(jnp.float32).T)           # Linear + Sigmoid
    return xf * y[:, :, None, None]


def _run_case(key, B, C, H, W, reduction, dtype=jnp.float32, path="auto",
              atol=1e-5, rtol=1e-5):
    Cr = max(1, C // reduction)
    kx, k1, k2 = jax.random.split(key, 3)
    x = jax.random.normal(kx, (B, C, H, W), dtype=jnp.float32).astype(dtype)
    w1 = jax.random.normal(k1, (Cr, C), dtype=jnp.float32) * (1.0 / jnp.sqrt(C))
    w2 = jax.random.normal(k2, (C, Cr), dtype=jnp.float32) * (1.0 / jnp.sqrt(Cr))

    y = jax.block_until_ready(se_layer(x, w1, w2, path=path))
    y_ref = se_layer_ref(x, w1, w2)
    assert y.shape == (B, C, H, W)
    assert y.dtype == x.dtype
    assert jnp.allclose(y.astype(jnp.float32), y_ref, atol=atol, rtol=rtol), (
        f"mismatch: case B={B} C={C} H={H} W={W} path={path} dtype={dtype}")


if __name__ == "__main__":
    key = jax.random.PRNGKey(0)
    k1, k2, k3, k4 = jax.random.split(key, 4)

    # Fused path, lane-aligned spatial (HW = 256).
    _run_case(k1, B=2, C=64, H=16, W=16, reduction=16)
    # Fused path, non-128-aligned spatial (HW = 49): no wrapper pad/slice,
    # partial lane vreg handled in-kernel via masked vst.
    _run_case(k2, B=2, C=32, H=7, W=7, reduction=16)
    # Two-phase path (gate precompute + tiled scale), HW = 1156 -> partial
    # trailing HW tile exercised.
    _run_case(k3, B=2, C=64, H=34, W=34, reduction=16, path="two_phase")
    # bf16 input: native bf16 scale pass on v6e/v7x, f32 fallback on v5e.
    _run_case(k4, B=2, C=64, H=14, W=14, reduction=16,
              dtype=jnp.bfloat16, atol=2e-2, rtol=2e-2)

    print("KERNEL_OK")
</pallas_src>

<mosaic_0001>
module attributes {stable_mosaic.version = 11 : i64} {
  func.func @_se_fused_kernel(%arg0: i32, %arg1: memref<1x64x256xf32, #tpu.memory_space<vmem>>, %arg2: memref<64x4xf32, #tpu.memory_space<vmem>>, %arg3: memref<64x4xf32, #tpu.memory_space<vmem>>, %arg4: memref<1x64x256xf32, #tpu.memory_space<vmem>>) attributes {dimension_semantics = [#tpu.dimension_semantics<parallel>], iteration_bounds = array<i64: 2>, scalar_prefetch = 0 : i64, scratch_operands = 0 : i64, tpu.core_type = #tpu.core_type<tc>, window_params = [{transform_indices = @transform_0, window_bounds = array<i64: 1, 64, 256>}, {pipeline_mode = #tpu.pipeline_mode<synchronous>, transform_indices = @transform_1, window_bounds = array<i64: 64, 4>}, {pipeline_mode = #tpu.pipeline_mode<synchronous>, transform_indices = @transform_2, window_bounds = array<i64: 64, 4>}, {transform_indices = @transform_3, window_bounds = array<i64: 1, 64, 256>}]} {
    %c0 = arith.constant 0 : index
    %c0_0 = arith.constant 0 : index
    %c0_1 = arith.constant 0 : index
    %0 = vector.load %arg1[%c0, %c0_0, %c0_1] : memref<1x64x256xf32, #tpu.memory_space<vmem>>, vector<1x64x256xf32>
    %1 = vector.shape_cast %0 : vector<1x64x256xf32> to vector<64x256xf32>
    %cst = arith.constant dense<0.000000e+00> : vector<64xf32>
    %2 = vector.multi_reduction <add>, %1, %cst [1] : vector<64x256xf32> to vector<64xf32>
    %3 = vector.shape_cast %2 : vector<64xf32> to vector<64x1xf32>
    %c0_2 = arith.constant 0 : index
    %c0_3 = arith.constant 0 : index
    %4 = vector.load %arg2[%c0_2, %c0_3] : memref<64x4xf32, #tpu.memory_space<vmem>>, vector<64x4xf32>
    %5 = vector.broadcast %3 : vector<64x1xf32> to vector<64x4xf32>
    %6 = arith.mulf %4, %5 : vector<64x4xf32>
    %cst_4 = arith.constant dense<0.000000e+00> : vector<4xf32>
    %7 = vector.multi_reduction <add>, %6, %cst_4 [0] : vector<64x4xf32> to vector<4xf32>
    %8 = vector.shape_cast %7 : vector<4xf32> to vector<1x4xf32>
    %cst_5 = arith.constant 0.000000e+00 : f32
    %9 = vector.broadcast %cst_5 : f32 to vector<1x4xf32>
    %10 = arith.maximumf %8, %9 : vector<1x4xf32>
    %c0_6 = arith.constant 0 : index
    %c0_7 = arith.constant 0 : index
    %11 = vector.load %arg3[%c0_6, %c0_7] : memref<64x4xf32, #tpu.memory_space<vmem>>, vector<64x4xf32>
    %12 = vector.broadcast %10 : vector<1x4xf32> to vector<64x4xf32>
    %13 = arith.mulf %11, %12 : vector<64x4xf32>
    %cst_8 = arith.constant dense<0.000000e+00> : vector<64xf32>
    %14 = vector.multi_reduction <add>, %13, %cst_8 [1] : vector<64x4xf32> to vector<64xf32>
    %15 = vector.shape_cast %14 : vector<64xf32> to vector<64x1xf32>
    %16 = arith.negf %15 : vector<64x1xf32>
    %17 = math.exp %16 : vector<64x1xf32>
    %cst_9 = arith.constant 1.000000e+00 : f32
    %18 = vector.broadcast %cst_9 : f32 to vector<64x1xf32>
    %19 = arith.addf %18, %17 : vector<64x1xf32>
    %20 = arith.divf %18, %19 : vector<64x1xf32>
    %c0_10 = arith.constant 0 : index
    %c0_11 = arith.constant 0 : index
    %c0_12 = arith.constant 0 : index
    %21 = vector.load %arg1[%c0_10, %c0_11, %c0_12] : memref<1x64x256xf32, #tpu.memory_space<vmem>>, vector<1x64x256xf32>
    %22 = vector.shape_cast %21 : vector<1x64x256xf32> to vector<64x256xf32>
    %23 = vector.broadcast %20 : vector<64x1xf32> to vector<64x256xf32>
    %24 = arith.mulf %22, %23 : vector<64x256xf32>
    %c0_13 = arith.constant 0 : index
    %c0_14 = arith.constant 0 : index
    %c0_15 = arith.constant 0 : index
    %25 = vector.load %arg4[%c0_13, %c0_14, %c0_15] : memref<1x64x256xf32, #tpu.memory_space<vmem>>, vector<1x64x256xf32>
    %26 = vector.shape_cast %25 : vector<1x64x256xf32> to vector<64x256xf32>
    %27 = vector.shape_cast %24 : vector<64x256xf32> to vector<1x64x256xf32>
    tpu.vector_store %arg4[%c0_13, %c0_14, %c0_15], %27 {strides = array<i32>} : memref<1x64x256xf32, #tpu.memory_space<vmem>>, vector<1x64x256xf32>,
    return
  }
  func.func @transform_0(%arg0: i32) -> (i32, i32, i32) {
    %c0_i32 = arith.constant 0 : i32
    %c0_i32_0 = arith.constant 0 : i32
    %c0_i32_1 = arith.constant 0 : i32
    return %arg0, %c0_i32, %c0_i32_0 : i32, i32, i32
  }
  func.func @transform_1(%arg0: i32) -> (i32, i32) {
    %c0_i32 = arith.constant 0 : i32
    %c0_i32_0 = arith.constant 0 : i32
    %c0_i32_1 = arith.constant 0 : i32
    return %c0_i32, %c0_i32_0 : i32, i32
  }
  func.func @transform_2(%arg0: i32) -> (i32, i32) {
    %c0_i32 = arith.constant 0 : i32
    %c0_i32_0 = arith.constant 0 : i32
    %c0_i32_1 = arith.constant 0 : i32
    return %c0_i32, %c0_i32_0 : i32, i32
  }
  func.func @transform_3(%arg0: i32) -> (i32, i32, i32) {
    %c0_i32 = arith.constant 0 : i32
    %c0_i32_0 = arith.constant 0 : i32
    %c0_i32_1 = arith.constant 0 : i32
    return %arg0, %c0_i32, %c0_i32_0 : i32, i32, i32
  }
}

</mosaic_0001>

<llo_original>
// kernel: tpu_custom_call.1
$region0: #{tpu_custom_call.1}
  #allocation0 [shape = 'u32[]', space=smem, size = 0x4, offset = 0x4, fixed_abs, tag = 'smem constant byte address 0x4 - core index']
  #allocation1 [shape = 'u32[144,128]{1,0:T(1,128)}', space=vmem, size = 0x12000, scoped, tag = 'internal scratch']
  %s0 = inlined_call_operand.hbm [shape: f32[2,64,256], index: 0, kind: input, shape index: {}]
  %s1 = inlined_call_operand.vmem [shape: f32[64,4], index: 1, kind: input, shape index: {}]
  %s2 = inlined_call_operand.vmem [shape: f32[64,4], index: 2, kind: input, shape index: {}]
  %s3 = inlined_call_operand.hbm [shape: f32[2,64,256], index: 3, kind: output, shape index: {}]
  %s4 = sld [smem:[#allocation0]]
  $region49: #{tpu_custom_call.1} parent=0
    _
  %s6 = ssub.s32 1, %s4
  %s7 = scalar_select 0, %s6, %s4
  $region1: #{tpu_custom_call.1} parent=0
    #allocation2 [shape = 'u8[131072]{0}', space=vmem, size = 0x20000, scoped, tag = 'input window, operand 0']
    #allocation3 [shape = 's32[2]{0}', space=sflag, size = 0x8, scoped, tag = 'scoped memory for tpu_custom_call.1']
    #allocation4 [shape = 's32[2]{0}', space=sflag, size = 0x8, scoped, tag = 'scoped memory for tpu_custom_call.1']
    #allocation5 [shape = 'u8[131072]{0}', space=vmem, size = 0x20000, scoped, tag = 'output window, operand 0']
    %8 = vsyncpa [#allocation3], 0
    %s9 = scalar_lea.sflag [#allocation3], 1
    %10 = vsyncpa %s9, 0
    %11 = vsyncpa [#allocation4], 0
    %s12 = scalar_lea.sflag [#allocation4], 1
    %13 = vsyncpa %s12, 0
    loop: start=0, step=1, limit=4
    $region2: #{tpu_custom_call.1} parent=1 // loop_pre_header
      _
    $region3: #{tpu_custom_call.1} parent=1 // loop_header
      %s15 = sphi 0, %s19
      %p16 = scmp.ge.s32.totalorder %s15, 4
      %s25 = sphi 0, %s27
      %s28 = sphi 0, %s25
      %s29 = sphi 0, %s28
      %s45 = sphi 0, %s29
      %s49 = sphi 0, %s49
      %s51 = sphi 0, %s49
      %s52 = sphi 0, %s51
      %s66 = sphi 0, %s52
      %s70 = sphi 0, %s70
      %s72 = sphi 0, %s70
      %s73 = sphi 0, %s72
      %s87 = sphi 0, %s73
      %s93 = sphi 0, %s95
      %s96 = sphi 0, %s93
      %s97 = sphi 0, %s96
      %s113 = sphi 0, %s97
    $region4: #{tpu_custom_call.1} parent=1 // loop_header_branch
      %18 = sbr.rel (%p16) target = $region8
    $region5: #{tpu_custom_call.1} parent=1 // loop_body
      %s20 = ssub.s32 %s15, 1
      %s21 = ssub.s32 %s15, 2
      %s22 = sadd.s32 %s15, 1
      %s23 = ssub.s32 %s15, %s22
      %p24 = scmp.eq.s32.totalorder %s23, 0
      %s26 = sadd.s32 %s25, 1
      %s27 = scalar_select %p24, %s25, %s26
      %p30 = pneg %p24
      %p31 = scmp.eq.s32.totalorder %s15, 1
      %p32 = por %p30, %p31
      %p33 = scmp.ne.s32.totalorder %s25, %s28
      %p34 = scmp.eq.s32.totalorder %s15, 0
      %p35 = por %p33, %p34
      %p36 = scmp.ne.s32.totalorder %s25, %s28
      %p37 = scmp.eq.s32.totalorder %s20, 1
      %p38 = por %p36, %p37
      %p39 = scmp.ne.s32.totalorder %s28, %s29
      %p40 = scmp.eq.s32.totalorder %s20, 0
      %p41 = por %p39, %p40
      %p42 = scmp.ne.s32.totalorder %s28, %s29
      %p43 = scmp.eq.s32.totalorder %s21, 1
      %p44 = por %p42, %p43
      %p46 = scmp.ne.s32.totalorder %s29, %s45
      %p47 = scmp.eq.s32.totalorder %s21, 0
      %p48 = por %p46, %p47
      %s50 = sadd.s32 %s49, 1
      %p53 = scmp.eq.s32.totalorder %s15, 1
      %p54 = scmp.ne.s32.totalorder %s49, %s51
      %p55 = scmp.eq.s32.totalorder %s15, 0
      %p56 = por %p54, %p55
      %p57 = scmp.ne.s32.totalorder %s49, %s51
      %p58 = scmp.eq.s32.totalorder %s20, 1
      %p59 = por %p57, %p58
      %p60 = scmp.ne.s32.totalorder %s51, %s52
      %p61 = scmp.eq.s32.totalorder %s20, 0
      %p62 = por %p60, %p61
      %p63 = scmp.ne.s32.totalorder %s51, %s52
      %p64 = scmp.eq.s32.totalorder %s21, 1
      %p65 = por %p63, %p64
      %p67 = scmp.ne.s32.totalorder %s52, %s66
      %p68 = scmp.eq.s32.totalorder %s21, 0
      %p69 = por %p67, %p68
      %s71 = sadd.s32 %s70, 1
      %p74 = scmp.eq.s32.totalorder %s15, 1
      %p75 = scmp.ne.s32.totalorder %s70, %s72
      %p76 = scmp.eq.s32.totalorder %s15, 0
      %p77 = por %p75, %p76
      %p78 = scmp.ne.s32.totalorder %s70, %s72
      %p79 = scmp.eq.s32.totalorder %s20, 1
      %p80 = por %p78, %p79
      %p81 = scmp.ne.s32.totalorder %s72, %s73
      %p82 = scmp.eq.s32.totalorder %s20, 0
      %p83 = por %p81, %p82
      %p84 = scmp.ne.s32.totalorder %s72, %s73
      %p85 = scmp.eq.s32.totalorder %s21, 1
      %p86 = por %p84, %p85
      %p88 = scmp.ne.s32.totalorder %s73, %s87
      %p89 = scmp.eq.s32.totalorder %s21, 0
      %p90 = por %p88, %p89
      %s91 = ssub.s32 %s15, %s22
      %p92 = scmp.eq.s32.totalorder %s91, 0
      %s94 = sadd.s32 %s93, 1
      %s95 = scalar_select %p92, %s93, %s94
      %p98 = pneg %p92
      %p99 = scmp.eq.s32.totalorder %s15, 1
      %p100 = por %p98, %p99
      %p101 = scmp.ne.s32.totalorder %s93, %s96
      %p102 = scmp.eq.s32.totalorder %s15, 0
      %p103 = por %p101, %p102
      %p104 = scmp.ne.s32.totalorder %s93, %s96
      %p105 = scmp.eq.s32.totalorder %s20, 1
      %p106 = por %p104, %p105
      %p107 = scmp.ne.s32.totalorder %s96, %s97
      %p108 = scmp.eq.s32.totalorder %s20, 0
      %p109 = por %p107, %p108
      %p110 = scmp.ne.s32.totalorder %s96, %s97
      %p111 = scmp.eq.s32.totalorder %s21, 1
      %p112 = por %p110, %p111
      %p114 = scmp.ne.s32.totalorder %s97, %s113
      %p115 = scmp.eq.s32.totalorder %s21, 0
      %p116 = por %p114, %p115
      %p117 = scmp.le.s32.totalorder 1, %s15
      %p118 = scmp.lt.s32.totalorder %s15, 3
      %p119 = pnand %p117, %p118
      %p120 = pneg %p119
      // Predicated region
      $region9: #{tpu_custom_call.1} parent=5 // pred_check
        _
      $region10: #{tpu_custom_call.1} parent=5 // pred_check_branch
        %122 = sbr.rel (%p119) target = $region12
      $region11: #{tpu_custom_call.1} parent=5 // pred_region
        %s123 = ssub.s32 %s15, 1
        // Predicated region
        $region13: #{tpu_custom_call.1} parent=11 // pred_check
          %p124 = pneg %p62
        $region14: #{tpu_custom_call.1} parent=11 // pred_check_branch
          %126 = sbr.rel (%p124) target = $region16
        $region15: #{tpu_custom_call.1} parent=11 // pred_region
          _
        $region16: #{tpu_custom_call.1} parent=11 // pred_fallthru
          _
        // Predicated region
        $region17: #{tpu_custom_call.1} parent=11 // pred_check
          %p127 = pneg %p83
        $region18: #{tpu_custom_call.1} parent=11 // pred_check_branch
          %129 = sbr.rel (%p127) target = $region20
        $region19: #{tpu_custom_call.1} parent=11 // pred_region
          _
        $region20: #{tpu_custom_call.1} parent=11 // pred_fallthru
          _
      $region12: #{tpu_custom_call.1} parent=5 // pred_fallthru
        _
      %p130 = scmp.lt.s32.totalorder %s15, 2
      // Predicated region
      $region21: #{tpu_custom_call.1} parent=5 // pred_check
        %p131 = pneg %p130
      $region22: #{tpu_custom_call.1} parent=5 // pred_check_branch
        %133 = sbr.rel (%p131) target = $region24
      $region23: #{tpu_custom_call.1} parent=5 // pred_region
        // Predicated region
        $region25: #{tpu_custom_call.1} parent=23 // pred_check
          %p134 = pneg %p35
        $region26: #{tpu_custom_call.1} parent=23 // pred_check_branch
          %136 = sbr.rel (%p134) target = $region28
        $region27: #{tpu_custom_call.1} parent=23 // pred_region
          %s137 = sand.u32 %s25, 1
          %s138 = scalar_lea.sflag [#allocation3], %s137
          %s139 = sand.u32 %s25, 1
          %s140 = smul.addr %s139, 128
          %s141 = scalar_lea.vmem [#allocation2], %s140
          %s143 = ssub.s32 2048, 2048
          %144 = vsyncadd %s138, %s143
          %s145 = smul.addr %s15, 16
          %s146 = smul.addr %s145, 128
          %s147 = scalar_lea.hbm %s0, %s146
          %s148 = sshll.u32 %s141, 4
          %s149 = int_to_ptr.vmem [resolvable:$true] %s148
          %154 = dma.hbm_to_vmem [thread:$0]  %s147, 2048, %s149, %s138, 256, 256, 16
        $region28: #{tpu_custom_call.1} parent=23 // pred_fallthru
          _
      $region24: #{tpu_custom_call.1} parent=5 // pred_fallthru
        _
      %p155 = scmp.le.s32.totalorder 1, %s15
      %p156 = scmp.lt.s32.totalorder %s15, 3
      %p157 = pnand %p155, %p156
      %p158 = pneg %p157
      // Predicated region
      $region29: #{tpu_custom_call.1} parent=5 // pred_check
        _
      $region30: #{tpu_custom_call.1} parent=5 // pred_check_branch
        %160 = sbr.rel (%p157) target = $region32
      $region31: #{tpu_custom_call.1} parent=5 // pred_region
        %s161 = ssub.s32 %s15, 1
        %s162 = sand.u32 %s28, 1
        %s163 = scalar_lea.sflag [#allocation3], %s162
        %s164 = sand.u32 %s28, 1
        %s165 = smul.addr %s164, 128
        %s166 = scalar_lea.vmem [#allocation2], %s165
        // Predicated region
        $region33: #{tpu_custom_call.1} parent=31 // pred_check
          %p167 = pneg %p41
        $region34: #{tpu_custom_call.1} parent=31 // pred_check_branch
          %169 = sbr.rel (%p167) target = $region36
        $region35: #{tpu_custom_call.1} parent=31 // pred_region
          %170 = dma.done %s163, 2048
        $region36: #{tpu_custom_call.1} parent=31 // pred_fallthru
          _
        %s171 = sand.u32 %s28, 1
        %s172 = scalar_lea.sflag [#allocation3], %s171
        %s173 = sand.u32 %s28, 1
        %s174 = smul.addr %s173, 128
        %s175 = scalar_lea.vmem [#allocation2], %s174
        %p176 = pneg %p41
        %p177 = pneg %p38
        %p178 = pneg %p62
        %p179 = pneg %p59
        %p180 = pneg %p83
        %p181 = pneg %p80
        %p182 = pneg %p109
        %p183 = pneg %p106
        %s184 = sand.u32 %s96, 1
        %s185 = scalar_lea.sflag [#allocation4], %s184
        %s186 = sand.u32 %s96, 1
        %s187 = smul.addr %s186, 128
        %s188 = scalar_lea.vmem [#allocation5], %s187
        %v189 = vld [vmem:[%s166] sm:$0xff]
        %v190 = vld [vmem:[%s166 + $0x8] sm:$0xff]
        %v191 = vld [vmem:[%s166 + $0x10] sm:$0xff]
        %v192 = vld [vmem:[%s166 + $0x18] sm:$0xff]
        %v193 = vld [vmem:[%s166 + $0x20] sm:$0xff]
        %v194 = vld [vmem:[%s166 + $0x28] sm:$0xff]
        %v195 = vld [vmem:[%s166 + $0x30] sm:$0xff]
        %v196 = vld [vmem:[%s166 + $0x38] sm:$0xff]
        %v197 = vld [vmem:[%s166 + $0x40] sm:$0xff]
        %v198 = vld [vmem:[%s166 + $0x48] sm:$0xff]
        %v199 = vld [vmem:[%s166 + $0x50] sm:$0xff]
        %v200 = vld [vmem:[%s166 + $0x58] sm:$0xff]
        %v201 = vld [vmem:[%s166 + $0x60] sm:$0xff]
        %v202 = vld [vmem:[%s166 + $0x68] sm:$0xff]
        %v203 = vld [vmem:[%s166 + $0x70] sm:$0xff]
        %v204 = vld [vmem:[%s166 + $0x78] sm:$0xff]
        %v205 = vadd.f32 %v189, %v190
        %206 = vadd.xlane.f32.xlu0 %v205
        %v207 = vpop.xlane.xlu0 %206
        %v208 = vadd.f32 %v191, %v192
        %209 = vadd.xlane.f32.xlu0 %v208
        %v210 = vpop.xlane.xlu0 %209
        %v211 = vadd.f32 %v193, %v194
        %212 = vadd.xlane.f32.xlu0 %v211
        %v213 = vpop.xlane.xlu0 %212
        %v214 = vadd.f32 %v195, %v196
        %215 = vadd.xlane.f32.xlu0 %v214
        %v216 = vpop.xlane.xlu0 %215
        %v217 = vadd.f32 %v197, %v198
        %218 = vadd.xlane.f32.xlu0 %v217
        %v219 = vpop.xlane.xlu0 %218
        %v220 = vadd.f32 %v199, %v200
        %221 = vadd.xlane.f32.xlu0 %v220
        %v222 = vpop.xlane.xlu0 %221
        %v223 = vadd.f32 %v201, %v202
        %224 = vadd.xlane.f32.xlu0 %v223
        %v225 = vpop.xlane.xlu0 %224
        %v226 = vadd.f32 %v203, %v204
        %227 = vadd.xlane.f32.xlu0 %v226
        %v228 = vpop.xlane.xlu0 %227
        %v229 = vld [vmem:[%s1] sm:$0xff]
        %v230 = vld [vmem:[%s1 + $0x8] sm:$0xff]
        %v231 = vld [vmem:[%s1 + $0x10] sm:$0xff]
        %v232 = vld [vmem:[%s1 + $0x18] sm:$0xff]
        %v233 = vld [vmem:[%s1 + $0x20] sm:$0xff]
        %v234 = vld [vmem:[%s1 + $0x28] sm:$0xff]
        %v235 = vld [vmem:[%s1 + $0x30] sm:$0xff]
        %v236 = vld [vmem:[%s1 + $0x38] sm:$0xff]
        %v237 = vmul.f32 %v229, %v207
        %v238 = vmul.f32 %v230, %v210
        %v239 = vmul.f32 %v231, %v213
        %v240 = vmul.f32 %v232, %v216
        %v241 = vmul.f32 %v233, %v219
        %v242 = vmul.f32 %v234, %v222
        %v243 = vmul.f32 %v235, %v225
        %v244 = vmul.f32 %v236, %v228
        %vm245 = vcmask 31744
        %v246 = vsel %vm245, %v237, 0.0
        %v247 = vsel %vm245, %v238, 0.0
        %v248 = vadd.f32 %v246, %v247
        %v249 = vsel %vm245, %v239, 0.0
        %v250 = vadd.f32 %v248, %v249
        %v251 = vsel %vm245, %v240, 0.0
        %v252 = vadd.f32 %v250, %v251
        %v253 = vsel %vm245, %v241, 0.0
        %v254 = vadd.f32 %v252, %v253
        %v255 = vsel %vm245, %v242, 0.0
        %v256 = vadd.f32 %v254, %v255
        %v257 = vsel %vm245, %v243, 0.0
        %v258 = vadd.f32 %v256, %v257
        %v259 = vsel %vm245, %v244, 0.0
        %v260 = vadd.f32 %v258, %v259
        %v261 = vrot.slane %v260, 4
        %v262 = vadd.f32 %v260, %v261
        %v263 = vrot.slane %v262, 2
        %v264 = vadd.f32 %v262, %v263
        %v265 = vrot.slane %v264, 1
        %v266 = vadd.f32 %v264, %v265
        %v267 = vmax.f32 %v266, 0.0
        %v268 = vld [vmem:[%s2] sm:$0xff]
        %v269 = vld [vmem:[%s2 + $0x8] sm:$0xff]
        %v270 = vld [vmem:[%s2 + $0x10] sm:$0xff]
        %v271 = vld [vmem:[%s2 + $0x18] sm:$0xff]
        %v272 = vld [vmem:[%s2 + $0x20] sm:$0xff]
        %v273 = vld [vmem:[%s2 + $0x28] sm:$0xff]
        %v274 = vld [vmem:[%s2 + $0x30] sm:$0xff]
        %v275 = vld [vmem:[%s2 + $0x38] sm:$0xff]
        %v276 = vmul.f32 %v268, %v267
        %v277 = vmul.f32 %v269, %v267
        %v278 = vmul.f32 %v270, %v267
        %v279 = vmul.f32 %v271, %v267
        %v280 = vmul.f32 %v272, %v267
        %v281 = vmul.f32 %v273, %v267
        %v282 = vmul.f32 %v274, %v267
        %v283 = vmul.f32 %v275, %v267
        %v284 = vsel %vm245, %v276, 0.0
        %285 = vadd.xlane.f32.xlu0 %v284
        %v286 = vpop.xlane.xlu0 %285
        %v287 = vsel %vm245, %v277, 0.0
        %288 = vadd.xlane.f32.xlu0 %v287
        %v289 = vpop.xlane.xlu0 %288
        %v290 = vsel %vm245, %v278, 0.0
        %291 = vadd.xlane.f32.xlu0 %v290
        %v292 = vpop.xlane.xlu0 %291
        %v293 = vsel %vm245, %v279, 0.0
        %294 = vadd.xlane.f32.xlu0 %v293
        %v295 = vpop.xlane.xlu0 %294
        %v296 = vsel %vm245, %v280, 0.0
        %297 = vadd.xlane.f32.xlu0 %v296
        %v298 = vpop.xlane.xlu0 %297
        %v299 = vsel %vm245, %v281, 0.0
        %300 = vadd.xlane.f32.xlu0 %v299
        %v301 = vpop.xlane.xlu0 %300
        %v302 = vsel %vm245, %v282, 0.0
        %303 = vadd.xlane.f32.xlu0 %v302
        %v304 = vpop.xlane.xlu0 %303
        %v305 = vsel %vm245, %v283, 0.0
        %306 = vadd.xlane.f32.xlu0 %v305
        %v307 = vpop.xlane.xlu0 %306
        %v308 = vxor.u32 %v286, 2147483648
        %v309 = vxor.u32 %v289, 2147483648
        %v310 = vxor.u32 %v292, 2147483648
        %v311 = vxor.u32 %v295, 2147483648
        %v312 = vxor.u32 %v298, 2147483648
        %v313 = vxor.u32 %v301, 2147483648
        %v314 = vxor.u32 %v304, 2147483648
        %v315 = vxor.u32 %v307, 2147483648
        %v316 = vmul.f32 %v308, 1.442695
        %v317 = vpow.pop %v316
        %v318 = vmul.f32 %v309, 1.442695
        %v319 = vpow.pop %v318
        %v320 = vmul.f32 %v310, 1.442695
        %v321 = vpow.pop %v320
        %v322 = vmul.f32 %v311, 1.442695
        %v323 = vpow.pop %v322
        %v324 = vmul.f32 %v312, 1.442695
        %v325 = vpow.pop %v324
        %v326 = vmul.f32 %v313, 1.442695
        %v327 = vpow.pop %v326
        %v328 = vmul.f32 %v314, 1.442695
        %v329 = vpow.pop %v328
        %v330 = vmul.f32 %v315, 1.442695
        %v331 = vpow.pop %v330
        %v332 = vadd.f32 %v317, 1.0
        %v333 = vadd.f32 %v319, 1.0
        %v334 = vadd.f32 %v321, 1.0
        %v335 = vadd.f32 %v323, 1.0
        %v336 = vadd.f32 %v325, 1.0
        %v337 = vadd.f32 %v327, 1.0
        %v338 = vadd.f32 %v329, 1.0
        %v339 = vadd.f32 %v331, 1.0
        %v340 = vrcp.pop %v332
        %v341 = vmul.f32 1.0, %v340
        %v342 = vrcp.pop %v333
        %v343 = vmul.f32 1.0, %v342
        %v344 = vrcp.pop %v334
        %v345 = vmul.f32 1.0, %v344
        %v346 = vrcp.pop %v335
        %v347 = vmul.f32 1.0, %v346
        %v348 = vrcp.pop %v336
        %v349 = vmul.f32 1.0, %v348
        %v350 = vrcp.pop %v337
        %v351 = vmul.f32 1.0, %v350
        %v352 = vrcp.pop %v338
        %v353 = vmul.f32 1.0, %v352
        %v354 = vrcp.pop %v339
        %v355 = vmul.f32 1.0, %v354
        %v356 = vmul.f32 %v189, %v341
        %v357 = vmul.f32 %v190, %v341
        %v358 = vmul.f32 %v191, %v343
        %v359 = vmul.f32 %v192, %v343
        %v360 = vmul.f32 %v193, %v345
        %v361 = vmul.f32 %v194, %v345
        %v362 = vmul.f32 %v195, %v347
        %v363 = vmul.f32 %v196, %v347
        %v364 = vmul.f32 %v197, %v349
        %v365 = vmul.f32 %v198, %v349
        %v366 = vmul.f32 %v199, %v351
        %v367 = vmul.f32 %v200, %v351
        %v368 = vmul.f32 %v201, %v353
        %v369 = vmul.f32 %v202, %v353
        %v370 = vmul.f32 %v203, %v355
        %v371 = vmul.f32 %v204, %v355
        %372 = vst [vmem:[%s188] sm:$0xff] %v356
        %373 = vst [vmem:[%s188 + $0x8] sm:$0xff] %v357
        %374 = vst [vmem:[%s188 + $0x10] sm:$0xff] %v358
        %375 = vst [vmem:[%s188 + $0x18] sm:$0xff] %v359
        %376 = vst [vmem:[%s188 + $0x20] sm:$0xff] %v360
        %377 = vst [vmem:[%s188 + $0x28] sm:$0xff] %v361
        %378 = vst [vmem:[%s188 + $0x30] sm:$0xff] %v362
        %379 = vst [vmem:[%s188 + $0x38] sm:$0xff] %v363
        %380 = vst [vmem:[%s188 + $0x40] sm:$0xff] %v364
        %381 = vst [vmem:[%s188 + $0x48] sm:$0xff] %v365
        %382 = vst [vmem:[%s188 + $0x50] sm:$0xff] %v366
        %383 = vst [vmem:[%s188 + $0x58] sm:$0xff] %v367
        %384 = vst [vmem:[%s188 + $0x60] sm:$0xff] %v368
        %385 = vst [vmem:[%s188 + $0x68] sm:$0xff] %v369
        %386 = vst [vmem:[%s188 + $0x70] sm:$0xff] %v370
        %387 = vst [vmem:[%s188 + $0x78] sm:$0xff] %v371
        %s388 = sand.u32 %s96, 1
        %s389 = scalar_lea.sflag [#allocation4], %s388
        %s390 = sand.u32 %s96, 1
        %s391 = smul.addr %s390, 128
        %s392 = scalar_lea.vmem [#allocation5], %s391
        // Predicated region
        $region37: #{tpu_custom_call.1} parent=31 // pred_check
          %p393 = pneg %p106
        $region38: #{tpu_custom_call.1} parent=31 // pred_check_branch
          %395 = sbr.rel (%p393) target = $region40
        $region39: #{tpu_custom_call.1} parent=31 // pred_region
          %s397 = ssub.s32 2048, 2048
          %398 = vsyncadd %s389, %s397
          %s399 = smul.addr %s20, 16
          %s400 = smul.addr %s399, 128
          %s401 = scalar_lea.hbm %s3, %s400
          %s402 = sshll.u32 %s392, 4
          %s403 = int_to_ptr.vmem [resolvable:$true] %s402
          %408 = dma.vmem_to_hbm [thread:$0]  %s403, 2048, %s401, %s389, 256, 256, 16
        $region40: #{tpu_custom_call.1} parent=31 // pred_fallthru
          _
      $region32: #{tpu_custom_call.1} parent=5 // pred_fallthru
        _
      %p409 = scmp.le.s32.totalorder 2, %s15
      // Predicated region
      $region41: #{tpu_custom_call.1} parent=5 // pred_check
        %p410 = pneg %p409
      $region42: #{tpu_custom_call.1} parent=5 // pred_check_branch
        %412 = sbr.rel (%p410) target = $region44
      $region43: #{tpu_custom_call.1} parent=5 // pred_region
        %s413 = ssub.s32 %s15, 2
        // Predicated region
        $region45: #{tpu_custom_call.1} parent=43 // pred_check
          %p414 = pneg %p112
        $region46: #{tpu_custom_call.1} parent=43 // pred_check_branch
          %416 = sbr.rel (%p414) target = $region48
        $region47: #{tpu_custom_call.1} parent=43 // pred_region
          %s417 = sand.u32 %s97, 1
          %s418 = scalar_lea.sflag [#allocation4], %s417
          %s419 = sand.u32 %s97, 1
          %s420 = smul.addr %s419, 128
          %s421 = scalar_lea.vmem [#allocation5], %s420
          %422 = dma.done %s418, 2048
        $region48: #{tpu_custom_call.1} parent=43 // pred_fallthru
          _
      $region44: #{tpu_custom_call.1} parent=5 // pred_fallthru
        _
    $region6: #{tpu_custom_call.1} parent=1 // loop_footer
      %s19 = sadd.s32 1, %s15
    $region7: #{tpu_custom_call.1} parent=1 // loop_footer_branch
      %14 = sbr.rel target = $region3
    $region8: #{tpu_custom_call.1} parent=1 // loop_exit
      _
    %423 = vsyncpa [#allocation3], 1
    %s424 = scalar_lea.sflag [#allocation3], 1
    %425 = vsyncpa %s424, 1
    %426 = vsyncpa [#allocation4], 1
    %s427 = scalar_lea.sflag [#allocation4], 1
    %428 = vsyncpa %s427, 1

</llo_original>
